<compile_context>
chip_gen: v7x
topology: tpu7x:2x2x1
jax: 0.10.0
libtpu: 0.0.40
codegen_flags: <defaults>
</compile_context>

<pallas_src>
import functools

import jax
import jax.numpy as jnp
from jax.experimental import pallas as pl
from jax.experimental.pallas import tpu as pltpu


def _round_up(x, m):
    return ((x + m - 1) // m) * m


def _pick_tile_m(m, requested):
    # >=8 grid steps once m is large enough (lets v7x shard the "parallel" grid
    # axis across its 2 TensorCores), big tiles otherwise (per-step overhead is
    # ~0.35us), always a multiple of 8 sublanes and never larger than the
    # sublane-rounded row count.
    t = min(int(requested), _round_up(pl.cdiv(m, 8), 128))
    t = min(max(t, 128), _round_up(m, 8))
    return max(8, _round_up(t, 8))


# -----------------------------------------------------------------------------
# Pallas kernel: polynomial feature expansion for one tile of rows.
#   x_ref: (tile_m, in_features)                       -- natural row-major block
#   o_ref: (tile_m, 1 + (in_features - 1) * degree)
# -----------------------------------------------------------------------------
def _poly_kernel(x_ref, o_ref, *, degree, in_features):
    x = x_ref[...]
    # Merged time + states passthrough: single store instead of two.
    o_ref[:, :in_features] = x.astype(o_ref.dtype)

    if degree >= 2:
        n_states = in_features - 1
        states = x[:, 1:in_features]
        if jnp.issubdtype(x_ref.dtype, jnp.floating):
            base = states.astype(jnp.float32)      # upcast in-vreg only
        else:
            base = states
        p = base
        off = in_features
        for _ in range(2, degree + 1):             # successive VPU multiplies
            p = p * base
            o_ref[:, off:off + n_states] = p.astype(o_ref.dtype)
            off += n_states


# -----------------------------------------------------------------------------
# Wrapper: flatten leading dims, tile over rows in the natural layout.
# No transposes, no padding, no dtype change on the HBM-facing arrays.
# -----------------------------------------------------------------------------
def polynomial_layer_forward(x, degree=2, tile_m=2048):
    """PolynomialLayer forward: x (..., f_in) -> (..., 1 + (f_in - 1) * degree)."""
    *lead, f_in = x.shape
    if degree < 1:
        return x[..., :1]                          # degree 0: only the time column
    if f_in < 2:
        return x                                   # no state components: passthrough
    f_out = 1 + (f_in - 1) * degree

    m = 1
    for d in lead:
        m *= d
    x2d = x.reshape(m, f_in)                       # free metadata reshape (row-major)

    tm = _pick_tile_m(m, tile_m)
    grid = (pl.cdiv(m, tm),)                       # ragged last block handled by Pallas

    kernel = functools.partial(_poly_kernel, degree=degree, in_features=f_in)
    y2d = pl.pallas_call(
        kernel,
        out_shape=jax.ShapeDtypeStruct((m, f_out), x.dtype),
        grid=grid,
        in_specs=[pl.BlockSpec((tm, f_in), lambda i: (i, 0))],
        out_specs=pl.BlockSpec((tm, f_out), lambda i: (i, 0)),
        compiler_params=pltpu.CompilerParams(dimension_semantics=("parallel",)),
    )(x2d)

    return y2d.reshape(*lead, f_out)               # free metadata reshape


# -----------------------------------------------------------------------------
# Pure-JAX reference for verification (same f32 repeated-multiply semantics).
# -----------------------------------------------------------------------------
def reference_forward(x, degree=2):
    xf = x.astype(jnp.float32)
    time = xf[..., :1]
    states = xf[..., 1:]
    parts = [time, states]
    p = states
    for _ in range(2, degree + 1):
        p = p * states
        parts.append(p)
    return jnp.concatenate(parts, axis=-1).astype(x.dtype)


if __name__ == "__main__":
    key = jax.random.PRNGKey(0)
    k1, k2 = jax.random.split(key)

    # PolynomialLayer(in_features=4, out_features=7, degree=2): x (batch, 4)
    # 520 rows -> 5 grid steps with a ragged last block (exercises the no-pad path).
    batch, in_features, degree = 520, 4, 2
    x = jax.random.uniform(k1, (batch, in_features), jnp.float32, -1.0, 1.0)

    out = polynomial_layer_forward(x, degree=degree)
    jax.block_until_ready(out)
    ref = reference_forward(x, degree=degree)
    assert out.shape == (batch, 1 + (in_features - 1) * degree)
    assert out.dtype == x.dtype
    assert jnp.allclose(out, ref, atol=1e-6, rtol=1e-6), "mismatch vs reference (f32, degree=2)"

    # bf16 input with leading batch dims and degree=3: dtype must be preserved.
    x3 = jax.random.normal(k2, (2, 64, 4), jnp.float32).astype(jnp.bfloat16)
    out3 = polynomial_layer_forward(x3, degree=3)
    jax.block_until_ready(out3)
    ref3 = reference_forward(x3, degree=3)
    assert out3.shape == (2, 64, 1 + 3 * 3)
    assert out3.dtype == jnp.bfloat16
    assert jnp.allclose(out3.astype(jnp.float32), ref3.astype(jnp.float32),
                        atol=1e-2, rtol=1e-2), "mismatch vs reference (bf16, degree=3)"

    print("KERNEL_OK")
</pallas_src>

<mosaic_0001>
module attributes {stable_mosaic.version = 11 : i64} {
  func.func @_poly_kernel(%arg0: i32, %arg1: memref<128x4xf32, #tpu.memory_space<vmem>>, %arg2: memref<128x7xf32, #tpu.memory_space<vmem>>) attributes {dimension_semantics = [#tpu.dimension_semantics<parallel>], iteration_bounds = array<i64: 5>, scalar_prefetch = 0 : i64, scratch_operands = 0 : i64, tpu.core_type = #tpu.core_type<tc>, window_params = [{transform_indices = @transform_0, window_bounds = array<i64: 128, 4>}, {transform_indices = @transform_1, window_bounds = array<i64: 128, 7>}]} {
    %c0 = arith.constant 0 : index
    %c0_0 = arith.constant 0 : index
    %0 = vector.load %arg1[%c0, %c0_0] : memref<128x4xf32, #tpu.memory_space<vmem>>, vector<128x4xf32>
    %c0_1 = arith.constant 0 : index
    %c0_2 = arith.constant 0 : index
    %1 = vector.load %arg2[%c0_1, %c0_2] : memref<128x7xf32, #tpu.memory_space<vmem>>, vector<128x4xf32>
    tpu.vector_store %arg2[%c0_1, %c0_2], %0 {strides = array<i32>} : memref<128x7xf32, #tpu.memory_space<vmem>>, vector<128x4xf32>,
    %2 = vector.extract_strided_slice %0 {offsets = [0, 1], sizes = [128, 3], strides = [1, 1]} : vector<128x4xf32> to vector<128x3xf32>
    %3 = arith.mulf %2, %2 : vector<128x3xf32>
    %c0_3 = arith.constant 0 : index
    %c4 = arith.constant 4 : index
    %4 = vector.load %arg2[%c0_3, %c4] : memref<128x7xf32, #tpu.memory_space<vmem>>, vector<128x3xf32>
    tpu.vector_store %arg2[%c0_3, %c4], %3 {strides = array<i32>} : memref<128x7xf32, #tpu.memory_space<vmem>>, vector<128x3xf32>,
    return
  }
  func.func @transform_0(%arg0: i32) -> (i32, i32) {
    %c0_i32 = arith.constant 0 : i32
    %c0_i32_0 = arith.constant 0 : i32
    return %arg0, %c0_i32 : i32, i32
  }
  func.func @transform_1(%arg0: i32) -> (i32, i32) {
    %c0_i32 = arith.constant 0 : i32
    %c0_i32_0 = arith.constant 0 : i32
    return %arg0, %c0_i32 : i32, i32
  }
}

</mosaic_0001>

<llo_original>
// kernel: tpu_custom_call.1
$region0: #{tpu_custom_call.1}
  #allocation0 [shape = 'u32[]', space=smem, size = 0x4, offset = 0x4, fixed_abs, tag = 'smem constant byte address 0x4 - core index']
  #allocation1 [shape = 'u32[144,128]{1,0:T(1,128)}', space=vmem, size = 0x12000, scoped, tag = 'internal scratch']
  %s0 = inlined_call_operand.vmem [shape: f32[520,4], index: 0, kind: input, shape index: {}]
  %s1 = inlined_call_operand.vmem [shape: f32[520,7], index: 1, kind: output, shape index: {}]
  %s2 = sld [smem:[#allocation0]]
  $region85: #{tpu_custom_call.1} parent=0
    _
  %s4 = ssub.s32 1, %s2
  %s5 = scalar_select 0, %s4, %s2
  $region1: #{tpu_custom_call.1} parent=0
    #allocation2 [shape = 'u8[131072]{0}', space=vmem, size = 0x20000, scoped, tag = 'output window, operand 0']
    loop: start=0, step=1, limit=7
    $region2: #{tpu_custom_call.1} parent=1 // loop_pre_header
      _
    $region3: #{tpu_custom_call.1} parent=1 // loop_header
      %s7 = sphi 0, %s11
      %p8 = scmp.ge.s32.totalorder %s7, 7
      %s17 = sphi 0, %s19
      %s20 = sphi 0, %s17
      %s21 = sphi 0, %s20
      %s37 = sphi 0, %s21
      %s43 = sphi 0, %s45
      %s46 = sphi 0, %s43
      %s47 = sphi 0, %s46
      %s63 = sphi 0, %s47
    $region4: #{tpu_custom_call.1} parent=1 // loop_header_branch
      %10 = sbr.rel (%p8) target = $region8
    $region5: #{tpu_custom_call.1} parent=1 // loop_body
      %s12 = ssub.s32 %s7, 1
      %s13 = ssub.s32 %s7, 2
      %s14 = sadd.s32 %s7, 1
      %s15 = ssub.s32 %s7, %s14
      %p16 = scmp.eq.s32.totalorder %s15, 0
      %s18 = sadd.s32 %s17, 1
      %s19 = scalar_select %p16, %s17, %s18
      %p22 = pneg %p16
      %p23 = scmp.eq.s32.totalorder %s7, 4
      %p24 = por %p22, %p23
      %p25 = scmp.ne.s32.totalorder %s17, %s20
      %p26 = scmp.eq.s32.totalorder %s7, 0
      %p27 = por %p25, %p26
      %p28 = scmp.ne.s32.totalorder %s17, %s20
      %p29 = scmp.eq.s32.totalorder %s12, 4
      %p30 = por %p28, %p29
      %p31 = scmp.ne.s32.totalorder %s20, %s21
      %p32 = scmp.eq.s32.totalorder %s12, 0
      %p33 = por %p31, %p32
      %p34 = scmp.ne.s32.totalorder %s20, %s21
      %p35 = scmp.eq.s32.totalorder %s13, 4
      %p36 = por %p34, %p35
      %p38 = scmp.ne.s32.totalorder %s21, %s37
      %p39 = scmp.eq.s32.totalorder %s13, 0
      %p40 = por %p38, %p39
      %s41 = ssub.s32 %s7, %s14
      %p42 = scmp.eq.s32.totalorder %s41, 0
      %s44 = sadd.s32 %s43, 1
      %s45 = scalar_select %p42, %s43, %s44
      %p48 = pneg %p42
      %p49 = scmp.eq.s32.totalorder %s7, 4
      %p50 = por %p48, %p49
      %p51 = scmp.ne.s32.totalorder %s43, %s46
      %p52 = scmp.eq.s32.totalorder %s7, 0
      %p53 = por %p51, %p52
      %p54 = scmp.ne.s32.totalorder %s43, %s46
      %p55 = scmp.eq.s32.totalorder %s12, 4
      %p56 = por %p54, %p55
      %p57 = scmp.ne.s32.totalorder %s46, %s47
      %p58 = scmp.eq.s32.totalorder %s12, 0
      %p59 = por %p57, %p58
      %p60 = scmp.ne.s32.totalorder %s46, %s47
      %p61 = scmp.eq.s32.totalorder %s13, 4
      %p62 = por %p60, %p61
      %p64 = scmp.ne.s32.totalorder %s47, %s63
      %p65 = scmp.eq.s32.totalorder %s13, 0
      %p66 = por %p64, %p65
      %p67 = scmp.le.s32.totalorder 1, %s7
      %p68 = scmp.lt.s32.totalorder %s7, 6
      %p69 = pnand %p67, %p68
      %p70 = pneg %p69
      // Predicated region
      $region9: #{tpu_custom_call.1} parent=5 // pred_check
        _
      $region10: #{tpu_custom_call.1} parent=5 // pred_check_branch
        %72 = sbr.rel (%p69) target = $region12
      $region11: #{tpu_custom_call.1} parent=5 // pred_region
        %s73 = ssub.s32 %s7, 1
      $region12: #{tpu_custom_call.1} parent=5 // pred_fallthru
        _
      %p74 = scmp.lt.s32.totalorder %s7, 5
      // Predicated region
      $region13: #{tpu_custom_call.1} parent=5 // pred_check
        %p75 = pneg %p74
      $region14: #{tpu_custom_call.1} parent=5 // pred_check_branch
        %77 = sbr.rel (%p75) target = $region16
      $region15: #{tpu_custom_call.1} parent=5 // pred_region
        // Predicated region
        $region17: #{tpu_custom_call.1} parent=15 // pred_check
          %p78 = pneg %p27
        $region18: #{tpu_custom_call.1} parent=15 // pred_check_branch
          %80 = sbr.rel (%p78) target = $region20
        $region19: #{tpu_custom_call.1} parent=15 // pred_region
          %s81 = smul.u32 16, %s7
          %s82 = ssub.s32 65, %s81
          %p83 = scmp.lt.s32.totalorder %s82, 16
          %s84 = scalar_select %p83, %s82, 16
          %s85 = smul.u32 128, %s84
          %p86 = scmp.lt.s32.totalorder %s81, 64
          %s87 = scalar_select %p86, %s81, 64
          %s88 = smul.addr %s87, 8
          %s89 = scalar_lea.vmem %s0, %s88
          %s90 = smul.u32 16, %s7
          %s91 = ssub.s32 65, %s90
          %p92 = scmp.lt.s32.totalorder %s91, 16
          %s93 = scalar_select %p92, %s91, 16
          %s94 = smul.u32 128, %s93
        $region20: #{tpu_custom_call.1} parent=15 // pred_fallthru
          _
      $region16: #{tpu_custom_call.1} parent=5 // pred_fallthru
        _
      %p95 = scmp.le.s32.totalorder 1, %s7
      %p96 = scmp.lt.s32.totalorder %s7, 6
      %p97 = pnand %p95, %p96
      %p98 = pneg %p97
      // Predicated region
      $region21: #{tpu_custom_call.1} parent=5 // pred_check
        _
      $region22: #{tpu_custom_call.1} parent=5 // pred_check_branch
        %100 = sbr.rel (%p97) target = $region24
      $region23: #{tpu_custom_call.1} parent=5 // pred_region
        %s101 = ssub.s32 %s7, 1
        %s102 = smul.u32 16, %s12
        %s103 = ssub.s32 65, %s102
        %p104 = scmp.lt.s32.totalorder %s103, 16
        %s105 = scalar_select %p104, %s103, 16
        %s106 = smul.u32 128, %s105
        %p107 = scmp.lt.s32.totalorder %s102, 64
        %s108 = scalar_select %p107, %s102, 64
        %s109 = smul.addr %s108, 8
        %s110 = scalar_lea.vmem %s0, %s109
        %p111 = pneg %p33
        %p112 = pneg %p30
        %p113 = pneg %p59
        %p114 = pneg %p56
        %s115 = sand.u32 %s46, 1
        %s116 = sand.u32 %s46, 1
        %s117 = smul.addr %s116, 128
        %s118 = scalar_lea.vmem [#allocation2], %s117
        %s119 = smul.u32 16, %s12
        %s120 = ssub.s32 65, %s119
        %p121 = scmp.lt.s32.totalorder %s120, 16
        %s122 = scalar_select %p121, %s120, 16
        %s123 = smul.u32 128, %s122
        %p124 = scmp.lt.s32.totalorder %s119, 64
        %s125 = scalar_select %p124, %s119, 64
        %s126 = smul.addr %s125, 8
        %s127 = scalar_lea.vmem %s0, %s126
        %s128 = smul.u32 16, %s12
        %s129 = ssub.s32 65, %s128
        %p130 = scmp.lt.s32.totalorder %s129, 16
        %s131 = scalar_select %p130, %s129, 16
        %s132 = smul.u32 128, %s131
        %s133 = smul.u32 16, %s12
        %s134 = ssub.s32 65, %s133
        %p135 = scmp.lt.s32.totalorder %s134, 16
        %s136 = scalar_select %p135, %s134, 16
        %s137 = smul.u32 128, %s136
        %v138 = vld [vmem:[%s127] sm:$0xff]
        %v139 = vld [vmem:[%s127 + $0x8] sm:$0xff]
        %v140 = vld [vmem:[%s127 + $0x10] sm:$0xff]
        %v141 = vld [vmem:[%s127 + $0x18] sm:$0xff]
        %v142 = vld [vmem:[%s127 + $0x20] sm:$0xff]
        %v143 = vld [vmem:[%s127 + $0x28] sm:$0xff]
        %v144 = vld [vmem:[%s127 + $0x30] sm:$0xff]
        %v145 = vld [vmem:[%s127 + $0x38] sm:$0xff]
        %v146 = vld [vmem:[%s127 + $0x40] sm:$0xff]
        %v147 = vld [vmem:[%s127 + $0x48] sm:$0xff]
        %v148 = vld [vmem:[%s127 + $0x50] sm:$0xff]
        %v149 = vld [vmem:[%s127 + $0x58] sm:$0xff]
        %v150 = vld [vmem:[%s127 + $0x60] sm:$0xff]
        %v151 = vld [vmem:[%s127 + $0x68] sm:$0xff]
        %v152 = vld [vmem:[%s127 + $0x70] sm:$0xff]
        %v153 = vld [vmem:[%s127 + $0x78] sm:$0xff]
        %vm154 = vcmask 31744
        %155 = vst.msk [vmem:[%s118] sm:$0xff] %vm154, %v138
        %156 = vst.msk [vmem:[%s118 + $0x8] sm:$0xff] %vm154, %v139
        %157 = vst.msk [vmem:[%s118 + $0x10] sm:$0xff] %vm154, %v140
        %158 = vst.msk [vmem:[%s118 + $0x18] sm:$0xff] %vm154, %v141
        %159 = vst.msk [vmem:[%s118 + $0x20] sm:$0xff] %vm154, %v142
        %160 = vst.msk [vmem:[%s118 + $0x28] sm:$0xff] %vm154, %v143
        %161 = vst.msk [vmem:[%s118 + $0x30] sm:$0xff] %vm154, %v144
        %162 = vst.msk [vmem:[%s118 + $0x38] sm:$0xff] %vm154, %v145
        %163 = vst.msk [vmem:[%s118 + $0x40] sm:$0xff] %vm154, %v146
        %164 = vst.msk [vmem:[%s118 + $0x48] sm:$0xff] %vm154, %v147
        %165 = vst.msk [vmem:[%s118 + $0x50] sm:$0xff] %vm154, %v148
        %166 = vst.msk [vmem:[%s118 + $0x58] sm:$0xff] %vm154, %v149
        %167 = vst.msk [vmem:[%s118 + $0x60] sm:$0xff] %vm154, %v150
        %168 = vst.msk [vmem:[%s118 + $0x68] sm:$0xff] %vm154, %v151
        %169 = vst.msk [vmem:[%s118 + $0x70] sm:$0xff] %vm154, %v152
        %170 = vst.msk [vmem:[%s118 + $0x78] sm:$0xff] %vm154, %v153
        %v171 = vmul.f32 %v138, %v138
        %v172 = vmul.f32 %v139, %v139
        %v173 = vmul.f32 %v140, %v140
        %v174 = vmul.f32 %v141, %v141
        %v175 = vmul.f32 %v142, %v142
        %v176 = vmul.f32 %v143, %v143
        %v177 = vmul.f32 %v144, %v144
        %v178 = vmul.f32 %v145, %v145
        %v179 = vmul.f32 %v146, %v146
        %v180 = vmul.f32 %v147, %v147
        %v181 = vmul.f32 %v148, %v148
        %v182 = vmul.f32 %v149, %v149
        %v183 = vmul.f32 %v150, %v150
        %v184 = vmul.f32 %v151, %v151
        %v185 = vmul.f32 %v152, %v152
        %v186 = vmul.f32 %v153, %v153
        %203 = vrot.lane.b32.xlu0 %v171, 3
        %v204 = vpop.permute.xlu0 %203
        %205 = vrot.lane.b32.xlu0 %v172, 3
        %v206 = vpop.permute.xlu0 %205
        %207 = vrot.lane.b32.xlu0 %v173, 3
        %v208 = vpop.permute.xlu0 %207
        %209 = vrot.lane.b32.xlu0 %v174, 3
        %v210 = vpop.permute.xlu0 %209
        %211 = vrot.lane.b32.xlu0 %v175, 3
        %v212 = vpop.permute.xlu0 %211
        %213 = vrot.lane.b32.xlu0 %v176, 3
        %v214 = vpop.permute.xlu0 %213
        %215 = vrot.lane.b32.xlu0 %v177, 3
        %v216 = vpop.permute.xlu0 %215
        %217 = vrot.lane.b32.xlu0 %v178, 3
        %v218 = vpop.permute.xlu0 %217
        %219 = vrot.lane.b32.xlu0 %v179, 3
        %v220 = vpop.permute.xlu0 %219
        %221 = vrot.lane.b32.xlu0 %v180, 3
        %v222 = vpop.permute.xlu0 %221
        %223 = vrot.lane.b32.xlu0 %v181, 3
        %v224 = vpop.permute.xlu0 %223
        %225 = vrot.lane.b32.xlu0 %v182, 3
        %v226 = vpop.permute.xlu0 %225
        %227 = vrot.lane.b32.xlu0 %v183, 3
        %v228 = vpop.permute.xlu0 %227
        %229 = vrot.lane.b32.xlu0 %v184, 3
        %v230 = vpop.permute.xlu0 %229
        %231 = vrot.lane.b32.xlu0 %v185, 3
        %v232 = vpop.permute.xlu0 %231
        %233 = vrot.lane.b32.xlu0 %v186, 3
        %v234 = vpop.permute.xlu0 %233
        %vm251 = vcmask 56352
        %252 = vst.msk [vmem:[%s118] sm:$0xff] %vm251, %v204
        %253 = vst.msk [vmem:[%s118 + $0x8] sm:$0xff] %vm251, %v206
        %254 = vst.msk [vmem:[%s118 + $0x10] sm:$0xff] %vm251, %v208
        %255 = vst.msk [vmem:[%s118 + $0x18] sm:$0xff] %vm251, %v210
        %256 = vst.msk [vmem:[%s118 + $0x20] sm:$0xff] %vm251, %v212
        %257 = vst.msk [vmem:[%s118 + $0x28] sm:$0xff] %vm251, %v214
        %258 = vst.msk [vmem:[%s118 + $0x30] sm:$0xff] %vm251, %v216
        %259 = vst.msk [vmem:[%s118 + $0x38] sm:$0xff] %vm251, %v218
        %260 = vst.msk [vmem:[%s118 + $0x40] sm:$0xff] %vm251, %v220
        %261 = vst.msk [vmem:[%s118 + $0x48] sm:$0xff] %vm251, %v222
        %262 = vst.msk [vmem:[%s118 + $0x50] sm:$0xff] %vm251, %v224
        %263 = vst.msk [vmem:[%s118 + $0x58] sm:$0xff] %vm251, %v226
        %264 = vst.msk [vmem:[%s118 + $0x60] sm:$0xff] %vm251, %v228
        %265 = vst.msk [vmem:[%s118 + $0x68] sm:$0xff] %vm251, %v230
        %266 = vst.msk [vmem:[%s118 + $0x70] sm:$0xff] %vm251, %v232
        %267 = vst.msk [vmem:[%s118 + $0x78] sm:$0xff] %vm251, %v234
        %s268 = sand.u32 %s46, 1
        %s269 = sand.u32 %s46, 1
        %s270 = smul.addr %s269, 128
        %s271 = scalar_lea.vmem [#allocation2], %s270
        // Predicated region
        $region25: #{tpu_custom_call.1} parent=23 // pred_check
          %p272 = pneg %p56
        $region26: #{tpu_custom_call.1} parent=23 // pred_check_branch
          %274 = sbr.rel (%p272) target = $region28
        $region27: #{tpu_custom_call.1} parent=23 // pred_region
          %s275 = smul.u32 16, %s12
          %s276 = ssub.s32 65, %s275
          %p277 = scmp.lt.s32.totalorder %s276, 16
          %s278 = scalar_select %p277, %s276, 16
          %s279 = smul.u32 128, %s278
          %p280 = scmp.ne.s32.totalorder 0, %s279
          %s281 = smul.addr %s275, 8
          %s282 = scalar_lea.vmem %s1, %s281
          // Predicated region
          $region29: #{tpu_custom_call.1} parent=27 // pred_check
            %p283 = pneg %p280
          $region30: #{tpu_custom_call.1} parent=27 // pred_check_branch
            %285 = sbr.rel (%p283) target = $region32
          $region31: #{tpu_custom_call.1} parent=27 // pred_region
            // Predicated region
            $region33: #{tpu_custom_call.1} parent=31 // pred_check
              _
            $region34: #{tpu_custom_call.1} parent=31 // pred_check_branch
              %287 = sbr.rel (0) target = $region36
            $region35: #{tpu_custom_call.1} parent=31 // pred_region
              // Predicated region
              $region55: #{tpu_custom_call.1} parent=35 // pred_check
                _
              $region56: #{tpu_custom_call.1} parent=35 // pred_check_branch
                %366 = sbr.rel (0) target = $region58
              $region57: #{tpu_custom_call.1} parent=35 // pred_region
                %s367 = sshrl.u32 %s278, 4
                // While loop
                $region59: #{tpu_custom_call.1} parent=57 // loop_pre_header
                  _
                $region60: #{tpu_custom_call.1} parent=57 // loop_header
                  %s369 = sphi 0, %s371
                  %p370 = scmp.ge.s32.totalorder %s369, %s367
                  %s374 = sphi 0, %s411
                  %s375 = sphi %s271, %s414
                  %s376 = sphi %s282, %s415
                $region61: #{tpu_custom_call.1} parent=57 // loop_header_branch
                  %373 = sbr.rel (%p370) target = $region65
                $region62: #{tpu_custom_call.1} parent=57 // loop_body
                  %v377 = vld [vmem:[%s375] sm:$0xff]
                  %378 = vst [vmem:[%s376] sm:$0xff] %v377
                  %v379 = vld [vmem:[%s375 + $0x8] sm:$0xff]
                  %380 = vst [vmem:[%s376 + $0x8] sm:$0xff] %v379
                  %v381 = vld [vmem:[%s375 + $0x10] sm:$0xff]
                  %382 = vst [vmem:[%s376 + $0x10] sm:$0xff] %v381
                  %v383 = vld [vmem:[%s375 + $0x18] sm:$0xff]
                  %384 = vst [vmem:[%s376 + $0x18] sm:$0xff] %v383
                  %v385 = vld [vmem:[%s375 + $0x20] sm:$0xff]
                  %386 = vst [vmem:[%s376 + $0x20] sm:$0xff] %v385
                  %v387 = vld [vmem:[%s375 + $0x28] sm:$0xff]
                  %388 = vst [vmem:[%s376 + $0x28] sm:$0xff] %v387
                  %v389 = vld [vmem:[%s375 + $0x30] sm:$0xff]
                  %390 = vst [vmem:[%s376 + $0x30] sm:$0xff] %v389
                  %v391 = vld [vmem:[%s375 + $0x38] sm:$0xff]
                  %392 = vst [vmem:[%s376 + $0x38] sm:$0xff] %v391
                  %v393 = vld [vmem:[%s375 + $0x40] sm:$0xff]
                  %394 = vst [vmem:[%s376 + $0x40] sm:$0xff] %v393
                  %v395 = vld [vmem:[%s375 + $0x48] sm:$0xff]
                  %396 = vst [vmem:[%s376 + $0x48] sm:$0xff] %v395
                  %v397 = vld [vmem:[%s375 + $0x50] sm:$0xff]
                  %398 = vst [vmem:[%s376 + $0x50] sm:$0xff] %v397
                  %v399 = vld [vmem:[%s375 + $0x58] sm:$0xff]
                  %400 = vst [vmem:[%s376 + $0x58] sm:$0xff] %v399
                  %v401 = vld [vmem:[%s375 + $0x60] sm:$0xff]
                  %402 = vst [vmem:[%s376 + $0x60] sm:$0xff] %v401
                  %v403 = vld [vmem:[%s375 + $0x68] sm:$0xff]
                  %404 = vst [vmem:[%s376 + $0x68] sm:$0xff] %v403
                  %v405 = vld [vmem:[%s375 + $0x70] sm:$0xff]
                  %406 = vst [vmem:[%s376 + $0x70] sm:$0xff] %v405
                  %v407 = vld [vmem:[%s375 + $0x78] sm:$0xff]
                  %408 = vst [vmem:[%s376 + $0x78] sm:$0xff] %v407
                  %s409 = sadd.s32 1, %s374
                  %p410 = scmp.ge.s32.totalorder %s409, %s367
                  %s411 = scalar_select %p410, 0, %s409
                  %s412 = smul.u32 %s411, 128
                  %s413 = smul.u32 %s411, 128
                  %s414 = scalar_lea.vmem %s271, %s412 [#allocation2]
                  %s415 = scalar_lea.vmem %s282, %s413
                $region63: #{tpu_custom_call.1} parent=57 // loop_footer
                  %s371 = sadd.s32 %s369, 1
                $region64: #{tpu_custom_call.1} parent=57 // loop_footer_branch
                  %368 = sbr.rel target = $region60
                $region65: #{tpu_custom_call.1} parent=57 // loop_exit
                  _
                %s416 = sshrl.u32 %s278, 4
                %s417 = sand.u32 %s278, 15
                %s418 = smul.u32 %s416, 16
                %s419 = smul.u32 8, %s418
                %s420 = scalar_lea.vmem %s271, %s419 [#allocation2]
                %s421 = smul.u32 8, %s418
                %s422 = scalar_lea.vmem %s282, %s421
                // While loop
                $region66: #{tpu_custom_call.1} parent=57 // loop_pre_header
                  _
                $region67: #{tpu_custom_call.1} parent=57 // loop_header
                  %s424 = sphi 0, %s426
                  %p425 = scmp.ge.s32.totalorder %s424, %s417
                  %s429 = sphi 0, %s436
                  %s430 = sphi %s420, %s439
                  %s431 = sphi %s422, %s440
                $region68: #{tpu_custom_call.1} parent=57 // loop_header_branch
                  %428 = sbr.rel (%p425) target = $region72
                $region69: #{tpu_custom_call.1} parent=57 // loop_body
                  %v432 = vld [vmem:[%s430] sm:$0xff]
                  %433 = vst [vmem:[%s431] sm:$0xff] %v432
                  %s434 = sadd.s32 1, %s429
                  %p435 = scmp.ge.s32.totalorder %s434, %s417
                  %s436 = scalar_select %p435, 0, %s434
                  %s437 = smul.u32 %s436, 8
                  %s438 = smul.u32 %s436, 8
                  %s439 = scalar_lea.vmem %s420, %s437 [#allocation2]
                  %s440 = scalar_lea.vmem %s422, %s438
                $region70: #{tpu_custom_call.1} parent=57 // loop_footer
                  %s426 = sadd.s32 %s424, 1
                $region71: #{tpu_custom_call.1} parent=57 // loop_footer_branch
                  %423 = sbr.rel target = $region67
                $region72: #{tpu_custom_call.1} parent=57 // loop_exit
                  _
              $region58: #{tpu_custom_call.1} parent=35 // pred_fallthru
                _
              // Predicated region
              $region73: #{tpu_custom_call.1} parent=35 // pred_check
                _
              $region74: #{tpu_custom_call.1} parent=35 // pred_check_branch
                %442 = sbr.rel target = $region76
              $region75: #{tpu_custom_call.1} parent=35 // pred_region
                _
              $region76: #{tpu_custom_call.1} parent=35 // pred_fallthru
                _
            $region36: #{tpu_custom_call.1} parent=31 // pred_fallthru
              _
            // Predicated region
            $region37: #{tpu_custom_call.1} parent=31 // pred_check
              _
            $region38: #{tpu_custom_call.1} parent=31 // pred_check_branch
              %289 = sbr.rel target = $region40
            $region39: #{tpu_custom_call.1} parent=31 // pred_region
              %s291 = sshrl.u32 %s278, 4
              // While loop
              $region41: #{tpu_custom_call.1} parent=39 // loop_pre_header
                _
              $region42: #{tpu_custom_call.1} parent=39 // loop_header
                %s293 = sphi 0, %s295
                %p294 = scmp.ge.s32.totalorder %s293, %s291
                %s298 = sphi 0, %s335
                %s299 = sphi %s271, %s338
                %s300 = sphi %s282, %s339
              $region43: #{tpu_custom_call.1} parent=39 // loop_header_branch
                %297 = sbr.rel (%p294) target = $region47
              $region44: #{tpu_custom_call.1} parent=39 // loop_body
                %v301 = vld [vmem:[%s299] sm:$0xff]
                %302 = vst [vmem:[%s300] sm:$0xff] %v301
                %v303 = vld [vmem:[%s299 + $0x8] sm:$0xff]
                %304 = vst [vmem:[%s300 + $0x8] sm:$0xff] %v303
                %v305 = vld [vmem:[%s299 + $0x10] sm:$0xff]
                %306 = vst [vmem:[%s300 + $0x10] sm:$0xff] %v305
                %v307 = vld [vmem:[%s299 + $0x18] sm:$0xff]
                %308 = vst [vmem:[%s300 + $0x18] sm:$0xff] %v307
                %v309 = vld [vmem:[%s299 + $0x20] sm:$0xff]
                %310 = vst [vmem:[%s300 + $0x20] sm:$0xff] %v309
                %v311 = vld [vmem:[%s299 + $0x28] sm:$0xff]
                %312 = vst [vmem:[%s300 + $0x28] sm:$0xff] %v311
                %v313 = vld [vmem:[%s299 + $0x30] sm:$0xff]
                %314 = vst [vmem:[%s300 + $0x30] sm:$0xff] %v313
                %v315 = vld [vmem:[%s299 + $0x38] sm:$0xff]
                %316 = vst [vmem:[%s300 + $0x38] sm:$0xff] %v315
                %v317 = vld [vmem:[%s299 + $0x40] sm:$0xff]
                %318 = vst [vmem:[%s300 + $0x40] sm:$0xff] %v317
                %v319 = vld [vmem:[%s299 + $0x48] sm:$0xff]
                %320 = vst [vmem:[%s300 + $0x48] sm:$0xff] %v319
                %v321 = vld [vmem:[%s299 + $0x50] sm:$0xff]
                %322 = vst [vmem:[%s300 + $0x50] sm:$0xff] %v321
                %v323 = vld [vmem:[%s299 + $0x58] sm:$0xff]
                %324 = vst [vmem:[%s300 + $0x58] sm:$0xff] %v323
                %v325 = vld [vmem:[%s299 + $0x60] sm:$0xff]
                %326 = vst [vmem:[%s300 + $0x60] sm:$0xff] %v325
                %v327 = vld [vmem:[%s299 + $0x68] sm:$0xff]
                %328 = vst [vmem:[%s300 + $0x68] sm:$0xff] %v327
                %v329 = vld [vmem:[%s299 + $0x70] sm:$0xff]
                %330 = vst [vmem:[%s300 + $0x70] sm:$0xff] %v329
                %v331 = vld [vmem:[%s299 + $0x78] sm:$0xff]
                %332 = vst [vmem:[%s300 + $0x78] sm:$0xff] %v331
                %s333 = sadd.s32 1, %s298
                %p334 = scmp.ge.s32.totalorder %s333, %s291
                %s335 = scalar_select %p334, 0, %s333
                %s336 = smul.u32 %s335, 128
                %s337 = smul.u32 %s335, 128
                %s338 = scalar_lea.vmem %s271, %s336 [#allocation2]
                %s339 = scalar_lea.vmem %s282, %s337
              $region45: #{tpu_custom_call.1} parent=39 // loop_footer
                %s295 = sadd.s32 %s293, 1
              $region46: #{tpu_custom_call.1} parent=39 // loop_footer_branch
                %292 = sbr.rel target = $region42
              $region47: #{tpu_custom_call.1} parent=39 // loop_exit
                _
              %s340 = sshrl.u32 %s278, 4
              %s341 = sand.u32 %s278, 15
              %s342 = smul.u32 %s340, 16
              %s343 = smul.u32 8, %s342
              %s344 = scalar_lea.vmem %s271, %s343 [#allocation2]
              %s345 = smul.u32 8, %s342
              %s346 = scalar_lea.vmem %s282, %s345
              // While loop
              $region48: #{tpu_custom_call.1} parent=39 // loop_pre_header
                _
              $region49: #{tpu_custom_call.1} parent=39 // loop_header
                %s348 = sphi 0, %s350
                %p349 = scmp.ge.s32.totalorder %s348, %s341
                %s353 = sphi 0, %s360
                %s354 = sphi %s344, %s363
                %s355 = sphi %s346, %s364
              $region50: #{tpu_custom_call.1} parent=39 // loop_header_branch
                %352 = sbr.rel (%p349) target = $region54
              $region51: #{tpu_custom_call.1} parent=39 // loop_body
                %v356 = vld [vmem:[%s354] sm:$0xff]
                %357 = vst [vmem:[%s355] sm:$0xff] %v356
                %s358 = sadd.s32 1, %s353
                %p359 = scmp.ge.s32.totalorder %s358, %s341
                %s360 = scalar_select %p359, 0, %s358
                %s361 = smul.u32 %s360, 8
                %s362 = smul.u32 %s360, 8
                %s363 = scalar_lea.vmem %s344, %s361 [#allocation2]
                %s364 = scalar_lea.vmem %s346, %s362
              $region52: #{tpu_custom_call.1} parent=39 // loop_footer
                %s350 = sadd.s32 %s348, 1
              $region53: #{tpu_custom_call.1} parent=39 // loop_footer_branch
                %347 = sbr.rel target = $region49
              $region54: #{tpu_custom_call.1} parent=39 // loop_exit
                _
            $region40: #{tpu_custom_call.1} parent=31 // pred_fallthru
              _
          $region32: #{tpu_custom_call.1} parent=27 // pred_fallthru
            _
          %443 = vnop
        $region28: #{tpu_custom_call.1} parent=23 // pred_fallthru
          _
      $region24: #{tpu_custom_call.1} parent=5 // pred_fallthru
        _
      %p444 = scmp.le.s32.totalorder 2, %s7
      // Predicated region
      $region77: #{tpu_custom_call.1} parent=5 // pred_check
        %p445 = pneg %p444
      $region78: #{tpu_custom_call.1} parent=5 // pred_check_branch
        %447 = sbr.rel (%p445) target = $region80
      $region79: #{tpu_custom_call.1} parent=5 // pred_region
        %s448 = ssub.s32 %s7, 2
        // Predicated region
        $region81: #{tpu_custom_call.1} parent=79 // pred_check
          %p449 = pneg %p62
        $region82: #{tpu_custom_call.1} parent=79 // pred_check_branch
          %451 = sbr.rel (%p449) target = $region84
        $region83: #{tpu_custom_call.1} parent=79 // pred_region
          %s452 = sand.u32 %s47, 1
          %s453 = sand.u32 %s47, 1
          %s454 = smul.addr %s453, 128
          %s455 = scalar_lea.vmem [#allocation2], %s454
        $region84: #{tpu_custom_call.1} parent=79 // pred_fallthru
          _
      $region80: #{tpu_custom_call.1} parent=5 // pred_fallthru
        _
    $region6: #{tpu_custom_call.1} parent=1 // loop_footer
      %s11 = sadd.s32 1, %s7
    $region7: #{tpu_custom_call.1} parent=1 // loop_footer_branch
      %6 = sbr.rel target = $region3
    $region8: #{tpu_custom_call.1} parent=1 // loop_exit
      _

</llo_original>
